<compile_context>
chip_gen: v5e
topology: v5e:2x2
jax: 0.10.0
libtpu: 0.0.40
codegen_flags: <defaults>
</compile_context>

<pallas_src>
import jax
import jax.numpy as jnp
from jax.experimental import pallas as pl
from jax.experimental.pallas import tpu as pltpu

_LANES = 128


def _round_up(n, m):
    return ((n + m - 1) // m) * m


def _pick_tile_b(batch, in_features, hidden_pad, *,
                 vmem_budget_bytes=24 << 20, max_tile=4096):
    """Batch tile (always a multiple of 128).

    Goals (per perf review):
      * >= 4 grid tiles, preferably an even count, so the x DMA pipelines
        behind the MXU and the "parallel" batch axis splits evenly across
        v7x's two TensorCores;
      * VMEM-aware: x double-buffer + resident w1 + f32 intermediates + out
        double-buffer must fit a conservative budget (well under v7x's 64 MiB
        physical VMEM and every chip's default scoped limit).
    """
    batch = max(int(batch), 1)
    # Conservative per-row / resident byte counts (f32).
    per_row = (2 * in_features        # x tile, double-buffered
               + 2 * hidden_pad       # h / p intermediates
               + 2) * 4               # out slab, double-buffered
    resident = (2 * in_features * hidden_pad + 4 * hidden_pad) * 4   # w1 (+ b1/w2 rows)
    avail = max(vmem_budget_bytes - resident, per_row * _LANES)
    cap = max(_LANES, (avail // per_row) // _LANES * _LANES)
    cap = min(cap, max_tile)

    if batch <= _LANES:
        return _LANES

    # Prefer an even tile count (4 first, then 6/8, then 2).
    for num_tiles in (4, 6, 8, 2):
        tb = _round_up(pl.cdiv(batch, num_tiles), _LANES)
        if tb <= cap and pl.cdiv(batch, tb) == num_tiles:
            return tb
    # Fallback: largest VMEM-safe tile (gives many tiles; fine for pipelining).
    return min(cap, _round_up(batch, _LANES))


def _vmem_limit_bytes(tile_b, in_features, hidden_pad):
    need = (2 * tile_b * in_features * 4        # x double buffer
            + 2 * in_features * hidden_pad * 4  # w1 (counted double-buffered)
            + 8 * hidden_pad * 4                # b1 / w2 rows
            + 2 * tile_b * hidden_pad * 4       # h / p f32 intermediates
            + 2 * tile_b * 4)                   # out slab double buffer
    # 2x headroom, never below the 32 MiB default, never above ~56 MiB so we
    # stay under v7x's 64 MiB physical VMEM.
    return int(min(max(2 * need, 32 << 20), 56 << 20))


def _grammar_mlp_kernel(x_ref, w1_ref, b1_ref, w2_ref, b2_ref, out_ref):
    x = x_ref[...]
    w1 = w1_ref[...]
    if w1.dtype == jnp.bfloat16:        # optional v5e fast path (see prepare_*)
        x = x.astype(jnp.bfloat16)

    # fc1 on the MXU: (tile_b, D) @ (D, 128) -> (tile_b, 128), f32 accumulate.
    h = jnp.dot(x, w1, preferred_element_type=jnp.float32)
    h = jnp.maximum(h + b1_ref[...], 0.0)                 # bias + ReLU (VPU)

    # fc2 (hidden -> 1): per-row dot product, kept off the MXU.
    # w2 arrives pre-transposed / zero-padded as a (1, 128) row.
    p = h * w2_ref[...]                                   # (tile_b, 128), VPU
    _, g, l = out_ref.shape                               # (1, tile_b // 128, 128)
    # Sublane-split reshape then a minor-dim reduce -> lane-dense (g, 128).
    z = p.reshape(g, l, p.shape[-1]).sum(axis=-1) + b2_ref[0]

    # Exact sigmoid (approx reciprocal was flagged for 0.5-threshold use).
    out_ref[...] = (1.0 / (1.0 + jnp.exp(-z))).reshape(out_ref.shape).astype(out_ref.dtype)


def prepare_grammar_params(w1, b1, w2, b2, *, use_bf16_matmul=False):
    """One-time weight prep (call at model-load time, NOT per forward).

    Pads the hidden dim 50 -> 128 with zeros so every in-kernel op is
    lane-dense; zero hidden columns give relu(0)=0 units which w2's zero
    padding then ignores, so the math is unchanged.

    w1: (D, H)  -- PyTorch fc1.weight transposed
    b1: (H,) or (1, H)
    w2: (H, 1)  -- PyTorch fc2.weight transposed
    b2: scalar-like
    """
    w1 = jnp.asarray(w1, jnp.float32)
    D, H = w1.shape
    H_pad = _round_up(H, _LANES)
    w1p = jnp.zeros((D, H_pad), jnp.float32).at[:, :H].set(w1)
    b1p = jnp.zeros((1, H_pad), jnp.float32).at[:, :H].set(
        jnp.reshape(jnp.asarray(b1, jnp.float32), (1, H)))
    w2p = jnp.zeros((1, H_pad), jnp.float32).at[:, :H].set(
        jnp.reshape(jnp.asarray(w2, jnp.float32), (1, H)))   # pre-transposed row
    b2s = jnp.reshape(jnp.asarray(b2, jnp.float32), (1,))
    if use_bf16_matmul:
        # v5e: f32 through the MXU is ~4x slower than bf16; accumulation stays f32.
        w1p = w1p.astype(jnp.bfloat16)
    return {"w1": w1p, "b1": b1p, "w2": w2p, "b2": b2s}


def grammar_model_forward(x, params, *, tile_b=None):
    """sigmoid(relu(x @ w1 + b1) @ w2 + b2) -> (B, 1) float32."""
    x = jnp.asarray(x, jnp.float32)
    B, D = x.shape
    w1p, b1p, w2p, b2s = params["w1"], params["b1"], params["w2"], params["b2"]
    if w1p.shape[0] != D:
        raise ValueError(f"x feature dim {D} != prepared w1 rows {w1p.shape[0]}")
    H_pad = w1p.shape[1]

    if tile_b is None:
        tile_b = _pick_tile_b(B, D, H_pad)
    if tile_b <= 0 or tile_b % _LANES != 0:
        raise ValueError("tile_b must be a positive multiple of 128")

    num_tiles = pl.cdiv(B, tile_b)
    g = tile_b // _LANES

    # TODO(synk): for extremely large feature counts (w1 + an x tile no longer
    # fit VMEM even at tile_b=128) add a K grid axis over D with a VMEM f32
    # accumulator instead of keeping w1 fully resident.

    out = pl.pallas_call(
        _grammar_mlp_kernel,
        # Lane-dense slab: out[i, s, l] <-> batch row i*tile_b + s*128 + l.
        # Rows past B in the last tile hold garbage and are sliced off below.
        out_shape=jax.ShapeDtypeStruct((num_tiles, g, _LANES), jnp.float32),
        grid=(num_tiles,),
        in_specs=[
            pl.BlockSpec((tile_b, D), lambda i: (i, 0)),        # x: batch-tiled, pipelined
            pl.BlockSpec((D, H_pad), lambda i: (0, 0)),         # w1: VMEM resident
            pl.BlockSpec((1, H_pad), lambda i: (0, 0)),         # b1 row: VMEM resident
            pl.BlockSpec((1, H_pad), lambda i: (0, 0)),         # w2 row: VMEM resident
            pl.BlockSpec(memory_space=pltpu.MemorySpace.SMEM),  # b2: SMEM scalar
        ],
        out_specs=pl.BlockSpec((1, g, _LANES), lambda i: (i, 0, 0)),
        compiler_params=pltpu.CompilerParams(
            dimension_semantics=("parallel",),                  # 2 TCs on v7x
            vmem_limit_bytes=_vmem_limit_bytes(tile_b, D, H_pad)),
    )(x, w1p, b1p, w2p, b2s)

    return out.reshape(num_tiles * tile_b, 1)[:B]


def _reference_forward(x, w1, b1, w2, b2):
    h = jnp.maximum(x @ w1 + jnp.reshape(b1, (1, -1)), 0.0)
    z = h @ w2 + jnp.reshape(b2, (1, 1))
    return 1.0 / (1.0 + jnp.exp(-z))


if __name__ == "__main__":
    key = jax.random.PRNGKey(0)
    k_x, k_w1, k_b1, k_w2, k_b2, k_x2 = jax.random.split(key, 6)

    batch = 8
    input_size = 64          # stands in for len(vectorizer.get_feature_names_out())
    hidden = 50
    out_dim = 1

    # Deterministic parameter init (PyTorch-Linear-style uniform bounds).
    lim1 = 1.0 / jnp.sqrt(input_size)
    lim2 = 1.0 / jnp.sqrt(hidden)
    w1 = jax.random.uniform(k_w1, (input_size, hidden), jnp.float32, -lim1, lim1)
    b1 = jax.random.uniform(k_b1, (1, hidden), jnp.float32, -lim1, lim1)
    w2 = jax.random.uniform(k_w2, (hidden, out_dim), jnp.float32, -lim2, lim2)
    b2 = jax.random.uniform(k_b2, (1, out_dim), jnp.float32, -lim2, lim2)

    # One-time weight prep, hoisted out of the forward path.
    params = prepare_grammar_params(w1, b1, w2, b2)

    # Check 1: small batch (single tile, partial block, no x padding).
    x = jax.random.uniform(k_x, (batch, input_size), jnp.float32, 0.0, 3.0)
    out = jax.block_until_ready(grammar_model_forward(x, params))
    ref = _reference_forward(x, w1, b1, w2, b2)
    assert out.shape == (batch, out_dim)
    assert jnp.allclose(out, ref, atol=2e-3, rtol=2e-3), "mismatch vs JAX reference"

    # Check 2: multi-tile, non-tile-aligned batch (partial last block, no x pad).
    batch2 = 1000
    x2 = jax.random.uniform(k_x2, (batch2, input_size), jnp.float32, 0.0, 3.0)
    out2 = jax.block_until_ready(grammar_model_forward(x2, params))
    ref2 = _reference_forward(x2, w1, b1, w2, b2)
    assert out2.shape == (batch2, out_dim)
    assert jnp.allclose(out2, ref2, atol=2e-3, rtol=2e-3), "mismatch vs JAX reference (tiled)"

    # Check 3: optional bf16 fc1 path (v5e fast path), explicit small tile.
    params_bf16 = prepare_grammar_params(w1, b1, w2, b2, use_bf16_matmul=True)
    out3 = jax.block_until_ready(grammar_model_forward(x2, params_bf16, tile_b=128))
    assert out3.shape == (batch2, out_dim)
    assert jnp.allclose(out3, ref2, atol=2e-2, rtol=2e-2), "mismatch vs JAX reference (bf16)"

    print("KERNEL_OK")
</pallas_src>

<mosaic_0001>
module attributes {stable_mosaic.version = 11 : i64} {
  func.func @_grammar_mlp_kernel(%arg0: i32, %arg1: memref<128x64xf32, #tpu.memory_space<vmem>>, %arg2: memref<64x128xf32, #tpu.memory_space<vmem>>, %arg3: memref<1x128xf32, #tpu.memory_space<vmem>>, %arg4: memref<1x128xf32, #tpu.memory_space<vmem>>, %arg5: memref<1xf32, #tpu.memory_space<smem>>, %arg6: memref<1x1x128xf32, #tpu.memory_space<vmem>>) attributes {dimension_semantics = [#tpu.dimension_semantics<parallel>], iteration_bounds = array<i64: 1>, scalar_prefetch = 0 : i64, scratch_operands = 0 : i64, tpu.core_type = #tpu.core_type<tc>, window_params = [{transform_indices = @transform_0, window_bounds = array<i64: 128, 64>}, {pipeline_mode = #tpu.pipeline_mode<synchronous>, transform_indices = @transform_1, window_bounds = array<i64: 64, 128>}, {pipeline_mode = #tpu.pipeline_mode<synchronous>, transform_indices = @transform_2, window_bounds = array<i64: 1, 128>}, {pipeline_mode = #tpu.pipeline_mode<synchronous>, transform_indices = @transform_3, window_bounds = array<i64: 1, 128>}, {transform_indices = @transform_4, window_bounds = array<i64: 1>}, {transform_indices = @transform_5, window_bounds = array<i64: 1, 1, 128>}]} {
    %c0 = arith.constant 0 : index
    %c0_0 = arith.constant 0 : index
    %0 = vector.load %arg1[%c0, %c0_0] : memref<128x64xf32, #tpu.memory_space<vmem>>, vector<128x64xf32>
    %c0_1 = arith.constant 0 : index
    %c0_2 = arith.constant 0 : index
    %1 = vector.load %arg2[%c0_1, %c0_2] : memref<64x128xf32, #tpu.memory_space<vmem>>, vector<64x128xf32>
    %cst = arith.constant dense<0.000000e+00> : vector<128x128xf32>
    %2 = tpu.matmul %0, %1, %cst {dimension_numbers = #tpu.dot_dimension_numbers<[1], [0], [0], [1], [0, 0, 1, 1], [], []>} : vector<128x64xf32>, vector<64x128xf32>, vector<128x128xf32> -> vector<128x128xf32>
    %c0_3 = arith.constant 0 : index
    %c0_4 = arith.constant 0 : index
    %3 = vector.load %arg3[%c0_3, %c0_4] : memref<1x128xf32, #tpu.memory_space<vmem>>, vector<1x128xf32>
    %4 = vector.broadcast %3 : vector<1x128xf32> to vector<128x128xf32>
    %5 = arith.addf %2, %4 : vector<128x128xf32>
    %cst_5 = arith.constant 0.000000e+00 : f32
    %6 = vector.broadcast %cst_5 : f32 to vector<128x128xf32>
    %7 = arith.maximumf %5, %6 : vector<128x128xf32>
    %c0_6 = arith.constant 0 : index
    %c0_7 = arith.constant 0 : index
    %8 = vector.load %arg4[%c0_6, %c0_7] : memref<1x128xf32, #tpu.memory_space<vmem>>, vector<1x128xf32>
    %9 = vector.broadcast %8 : vector<1x128xf32> to vector<128x128xf32>
    %10 = arith.mulf %7, %9 : vector<128x128xf32>
    %11 = vector.shape_cast %10 : vector<128x128xf32> to vector<1x128x128xf32>
    %cst_8 = arith.constant dense<0.000000e+00> : vector<1x128xf32>
    %12 = vector.multi_reduction <add>, %11, %cst_8 [2] : vector<1x128x128xf32> to vector<1x128xf32>
    %c0_9 = arith.constant 0 : index
    %13 = memref.load %arg5[%c0_9] : memref<1xf32, #tpu.memory_space<smem>>
    %14 = vector.broadcast %13 : f32 to vector<1x128xf32>
    %15 = arith.addf %12, %14 : vector<1x128xf32>
    %cst_10 = arith.constant 0.000000e+00 : f32
    %16 = vector.broadcast %cst_10 : f32 to vector<1x128xf32>
    %17 = arith.subf %16, %15 : vector<1x128xf32>
    %18 = math.exp %17 : vector<1x128xf32>
    %cst_11 = arith.constant 1.000000e+00 : f32
    %19 = vector.broadcast %cst_11 : f32 to vector<1x128xf32>
    %20 = arith.addf %19, %18 : vector<1x128xf32>
    %cst_12 = arith.constant 1.000000e+00 : f32
    %21 = vector.broadcast %cst_12 : f32 to vector<1x128xf32>
    %22 = arith.divf %21, %20 : vector<1x128xf32>
    %23 = vector.shape_cast %22 : vector<1x128xf32> to vector<1x1x128xf32>
    %c0_13 = arith.constant 0 : index
    %c0_14 = arith.constant 0 : index
    %c0_15 = arith.constant 0 : index
    %24 = vector.load %arg6[%c0_13, %c0_14, %c0_15] : memref<1x1x128xf32, #tpu.memory_space<vmem>>, vector<1x1x128xf32>
    tpu.vector_store %arg6[%c0_13, %c0_14, %c0_15], %23 {strides = array<i32>} : memref<1x1x128xf32, #tpu.memory_space<vmem>>, vector<1x1x128xf32>,
    return
  }
  func.func @transform_0(%arg0: i32) -> (i32, i32) {
    %c0_i32 = arith.constant 0 : i32
    %c0_i32_0 = arith.constant 0 : i32
    return %arg0, %c0_i32 : i32, i32
  }
  func.func @transform_1(%arg0: i32) -> (i32, i32) {
    %c0_i32 = arith.constant 0 : i32
    %c0_i32_0 = arith.constant 0 : i32
    %c0_i32_1 = arith.constant 0 : i32
    return %c0_i32, %c0_i32_0 : i32, i32
  }
  func.func @transform_2(%arg0: i32) -> (i32, i32) {
    %c0_i32 = arith.constant 0 : i32
    %c0_i32_0 = arith.constant 0 : i32
    %c0_i32_1 = arith.constant 0 : i32
    return %c0_i32, %c0_i32_0 : i32, i32
  }
  func.func @transform_3(%arg0: i32) -> (i32, i32) {
    %c0_i32 = arith.constant 0 : i32
    %c0_i32_0 = arith.constant 0 : i32
    %c0_i32_1 = arith.constant 0 : i32
    return %c0_i32, %c0_i32_0 : i32, i32
  }
  func.func @transform_4(%arg0: i32) -> i32 {
    %c0_i32 = arith.constant 0 : i32
    %c0_i32_0 = arith.constant 0 : i32
    return %c0_i32 : i32
  }
  func.func @transform_5(%arg0: i32) -> (i32, i32, i32) {
    %c0_i32 = arith.constant 0 : i32
    %c0_i32_0 = arith.constant 0 : i32
    %c0_i32_1 = arith.constant 0 : i32
    return %arg0, %c0_i32, %c0_i32_0 : i32, i32, i32
  }
}

</mosaic_0001>

<llo_original>
// kernel: tpu_custom_call.1
$region0: #{tpu_custom_call.1}
  #allocation0 [shape = 'u32[]', space=smem, size = 0x4, offset = 0x4, fixed_abs, tag = 'smem constant byte address 0x4 - core index']
  #allocation1 [shape = 'u32[72,128]{1,0:T(1,128)}', space=vmem, size = 0x9000, scoped, tag = 'internal scratch']
  #allocation2 [shape = 'f32[1]{0:T(128)S(6)}', space=smem, size = 0x200, scoped, tag = 'scoped memory for tpu_custom_call.1']
  %s0 = inlined_call_operand.hbm [shape: f32[8,64], index: 0, kind: input, shape index: {}]
  %s1 = inlined_call_operand.hbm [shape: f32[64,128], index: 1, kind: input, shape index: {}]
  %s2 = inlined_call_operand.vmem [shape: f32[1,128], index: 2, kind: input, shape index: {}]
  %s3 = inlined_call_operand.vmem [shape: f32[1,128], index: 3, kind: input, shape index: {}]
  %s4 = inlined_call_operand.<no memory space> [shape: f32[1], index: 4, kind: input, shape index: {}]
  %s5 = inlined_call_operand.hbm [shape: f32[1,1,128], index: 5, kind: output, shape index: {}]
  %s6 = sld [smem:[#allocation0]]
  $region38: #{tpu_custom_call.1} parent=0
    _
  %s8 = ssub.s32 1, %s6
  %s9 = scalar_select 0, %s8, %s6
  %10 = sst [smem:[#allocation2]] %s4
  $region1: #{tpu_custom_call.1} parent=0
    #allocation3 [shape = 'u8[65536]{0}', space=vmem, size = 0x10000, scoped, tag = 'input window, operand 0, single buffered']
    #allocation4 [shape = 's32[1]{0}', space=sflag, size = 0x4, scoped, tag = 'scoped memory for tpu_custom_call.1']
    #allocation5 [shape = 's32[1]{0}', space=sflag, size = 0x4, scoped, tag = 'scoped memory for tpu_custom_call.1']
    #allocation6 [shape = 'u8[32768]{0}', space=vmem, size = 0x8000, scoped, tag = 'input window, operand 1, single buffered']
    #allocation7 [shape = 's32[1]{0}', space=sflag, size = 0x4, scoped, tag = 'scoped memory for tpu_custom_call.1']
    #allocation8 [shape = 'u8[512]{0}', space=vmem, size = 0x400, scoped, tag = 'output window, operand 0, single buffered']
    %11 = vsyncpa [#allocation4], 0
    %12 = vsyncpa [#allocation7], 0
    %13 = vsyncpa [#allocation5], 0
    // Predicated region
    $region2: #{tpu_custom_call.1} parent=1 // pred_check
      _
    $region3: #{tpu_custom_call.1} parent=1 // pred_check_branch
      %15 = sbr.rel (0) target = $region5
    $region4: #{tpu_custom_call.1} parent=1 // pred_region
      %17 = vsyncadd [#allocation4], 1920
      %s18 = sshll.u32 %s0, 4
      %s19 = int_to_ptr.hbm [resolvable:$true] %s18
      %s20 = sshll.u32 [#allocation3], 4
      %s21 = int_to_ptr.vmem [resolvable:$true] %s20
      %26 = dma.hbm_to_vmem [thread:$0]  %s19, 128, %s21, [#allocation4], 128, 128, 8
    $region5: #{tpu_custom_call.1} parent=1 // pred_fallthru
      _
    // Predicated region
    $region6: #{tpu_custom_call.1} parent=1 // pred_check
      _
    $region7: #{tpu_custom_call.1} parent=1 // pred_check_branch
      %28 = sbr.rel (0) target = $region9
    $region8: #{tpu_custom_call.1} parent=1 // pred_region
      %30 = vsyncadd [#allocation7], 0
      %s31 = sshll.u32 %s1, 4
      %s32 = int_to_ptr.hbm [resolvable:$true] %s31
      %s33 = sshll.u32 [#allocation6], 4
      %s34 = int_to_ptr.vmem [resolvable:$true] %s33
      %39 = dma.hbm_to_vmem [thread:$0]  %s32, 1024, %s34, [#allocation7], 128, 128, 8
    $region9: #{tpu_custom_call.1} parent=1 // pred_fallthru
      _
    // Predicated region
    $region10: #{tpu_custom_call.1} parent=1 // pred_check
      _
    $region11: #{tpu_custom_call.1} parent=1 // pred_check_branch
      %41 = sbr.rel (0) target = $region13
    $region12: #{tpu_custom_call.1} parent=1 // pred_region
      _
    $region13: #{tpu_custom_call.1} parent=1 // pred_fallthru
      _
    // Predicated region
    $region14: #{tpu_custom_call.1} parent=1 // pred_check
      _
    $region15: #{tpu_custom_call.1} parent=1 // pred_check_branch
      %43 = sbr.rel (0) target = $region17
    $region16: #{tpu_custom_call.1} parent=1 // pred_region
      _
    $region17: #{tpu_custom_call.1} parent=1 // pred_fallthru
      _
    // Predicated region
    $region18: #{tpu_custom_call.1} parent=1 // pred_check
      _
    $region19: #{tpu_custom_call.1} parent=1 // pred_check_branch
      %45 = sbr.rel (0) target = $region21
    $region20: #{tpu_custom_call.1} parent=1 // pred_region
      _
    $region21: #{tpu_custom_call.1} parent=1 // pred_fallthru
      _
    // Predicated region
    $region22: #{tpu_custom_call.1} parent=1 // pred_check
      _
    $region23: #{tpu_custom_call.1} parent=1 // pred_check_branch
      %47 = sbr.rel (0) target = $region25
    $region24: #{tpu_custom_call.1} parent=1 // pred_region
      %49 = dma.done [#allocation4], 2048
    $region25: #{tpu_custom_call.1} parent=1 // pred_fallthru
      _
    // Predicated region
    $region26: #{tpu_custom_call.1} parent=1 // pred_check
      _
    $region27: #{tpu_custom_call.1} parent=1 // pred_check_branch
      %51 = sbr.rel (0) target = $region29
    $region28: #{tpu_custom_call.1} parent=1 // pred_region
      %53 = dma.done [#allocation7], 1024
    $region29: #{tpu_custom_call.1} parent=1 // pred_fallthru
      _
    %v54 = vld [vmem:[#allocation3] sm:$0xff]
    %v55 = vld [vmem:[#allocation3 + $0x8] sm:$0xff]
    %v56 = vld [vmem:[#allocation3 + $0x10] sm:$0xff]
    %v57 = vld [vmem:[#allocation3 + $0x18] sm:$0xff]
    %v58 = vld [vmem:[#allocation3 + $0x20] sm:$0xff]
    %v59 = vld [vmem:[#allocation3 + $0x28] sm:$0xff]
    %v60 = vld [vmem:[#allocation3 + $0x30] sm:$0xff]
    %v61 = vld [vmem:[#allocation3 + $0x38] sm:$0xff]
    %v62 = vld [vmem:[#allocation3 + $0x40] sm:$0xff]
    %v63 = vld [vmem:[#allocation3 + $0x48] sm:$0xff]
    %v64 = vld [vmem:[#allocation3 + $0x50] sm:$0xff]
    %v65 = vld [vmem:[#allocation3 + $0x58] sm:$0xff]
    %v66 = vld [vmem:[#allocation3 + $0x60] sm:$0xff]
    %v67 = vld [vmem:[#allocation3 + $0x68] sm:$0xff]
    %v68 = vld [vmem:[#allocation3 + $0x70] sm:$0xff]
    %v69 = vld [vmem:[#allocation3 + $0x78] sm:$0xff]
    %v70 = vld [vmem:[#allocation6] sm:$0xff]
    %v71 = vld [vmem:[#allocation6 + $0x8] sm:$0xff]
    %v72 = vld [vmem:[#allocation6 + $0x10] sm:$0xff]
    %v73 = vld [vmem:[#allocation6 + $0x18] sm:$0xff]
    %v74 = vld [vmem:[#allocation6 + $0x20] sm:$0xff]
    %v75 = vld [vmem:[#allocation6 + $0x28] sm:$0xff]
    %v76 = vld [vmem:[#allocation6 + $0x30] sm:$0xff]
    %v77 = vld [vmem:[#allocation6 + $0x38] sm:$0xff]
    %v78 = vld [vmem:[%s2] sm:$0x1]
    %v80 = vperm.slane %v78, 0
    %vm82 = vcmask 523264
    %v84 = vsel %vm82, %v54, 0
    %v87 = vsel %vm82, %v55, 0
    %v90 = vsel %vm82, %v56, 0
    %v93 = vsel %vm82, %v57, 0
    %v96 = vsel %vm82, %v58, 0
    %v99 = vsel %vm82, %v59, 0
    %v102 = vsel %vm82, %v60, 0
    %v105 = vsel %vm82, %v61, 0
    %v108 = vsel %vm82, %v62, 0
    %v111 = vsel %vm82, %v63, 0
    %v114 = vsel %vm82, %v64, 0
    %v117 = vsel %vm82, %v65, 0
    %v120 = vsel %vm82, %v66, 0
    %v123 = vsel %vm82, %v67, 0
    %v126 = vsel %vm82, %v68, 0
    %v129 = vsel %vm82, %v69, 0
    %131 = vmatpush.msra.mxu0 0.0
    %132 = vmatpush.msra.mxu0 0.0
    %133 = vmatpush.msra.mxu0 0.0
    %134 = vmatpush.msra.mxu0 0.0
    %135 = vmatpush.msra.mxu0 0.0
    %136 = vmatpush.msra.mxu0 0.0
    %137 = vmatpush.msra.mxu0 0.0
    %138 = vmatpush.msra.mxu0 0.0
    %139 = vmatpush.msra.mxu0 %v77
    %140 = vmatpush.msra.mxu0 %v76
    %141 = vmatpush.msra.mxu0 %v75
    %142 = vmatpush.msra.mxu0 %v74
    %143 = vmatpush.msra.mxu0 %v73
    %144 = vmatpush.msra.mxu0 %v72
    %145 = vmatpush.msra.mxu0 %v71
    %146 = vmatpush.msra.mxu0 %v70
    %147 = vmatmul.f32.gmra.mxu0 %v84
    %v148 = vpop.f32.mrf.mxu0
    %v149 = vadd.f32 %v80, %v148
    %150 = vmatmul.f32.gmra.mxu0 %v87
    %v151 = vpop.f32.mrf.mxu0
    %v152 = vadd.f32 %v80, %v151
    %153 = vmatmul.f32.gmra.mxu0 %v90
    %v154 = vpop.f32.mrf.mxu0
    %v155 = vadd.f32 %v80, %v154
    %156 = vmatmul.f32.gmra.mxu0 %v93
    %v157 = vpop.f32.mrf.mxu0
    %v158 = vadd.f32 %v80, %v157
    %159 = vmatmul.f32.gmra.mxu0 %v96
    %v160 = vpop.f32.mrf.mxu0
    %v161 = vadd.f32 %v80, %v160
    %162 = vmatmul.f32.gmra.mxu0 %v99
    %v163 = vpop.f32.mrf.mxu0
    %v164 = vadd.f32 %v80, %v163
    %165 = vmatmul.f32.gmra.mxu0 %v102
    %v166 = vpop.f32.mrf.mxu0
    %v167 = vadd.f32 %v80, %v166
    %168 = vmatmul.f32.gmra.mxu0 %v105
    %v169 = vpop.f32.mrf.mxu0
    %v170 = vadd.f32 %v80, %v169
    %171 = vmatmul.f32.gmra.mxu0 %v108
    %v172 = vpop.f32.mrf.mxu0
    %v173 = vadd.f32 %v80, %v172
    %174 = vmatmul.f32.gmra.mxu0 %v111
    %v175 = vpop.f32.mrf.mxu0
    %v176 = vadd.f32 %v80, %v175
    %177 = vmatmul.f32.gmra.mxu0 %v114
    %v178 = vpop.f32.mrf.mxu0
    %v179 = vadd.f32 %v80, %v178
    %180 = vmatmul.f32.gmra.mxu0 %v117
    %v181 = vpop.f32.mrf.mxu0
    %v182 = vadd.f32 %v80, %v181
    %183 = vmatmul.f32.gmra.mxu0 %v120
    %v184 = vpop.f32.mrf.mxu0
    %v185 = vadd.f32 %v80, %v184
    %186 = vmatmul.f32.gmra.mxu0 %v123
    %v187 = vpop.f32.mrf.mxu0
    %v188 = vadd.f32 %v80, %v187
    %189 = vmatmul.f32.gmra.mxu0 %v126
    %v190 = vpop.f32.mrf.mxu0
    %v191 = vadd.f32 %v80, %v190
    %192 = vmatmul.f32.gmra.mxu0 %v129
    %v193 = vpop.f32.mrf.mxu0
    %v194 = vadd.f32 %v80, %v193
    %195 = vdwg.mxu0
    %v196 = vmax.f32 %v149, 0.0
    %v197 = vmax.f32 %v152, 0.0
    %v198 = vmax.f32 %v155, 0.0
    %v199 = vmax.f32 %v158, 0.0
    %v200 = vmax.f32 %v161, 0.0
    %v201 = vmax.f32 %v164, 0.0
    %v202 = vmax.f32 %v167, 0.0
    %v203 = vmax.f32 %v170, 0.0
    %v204 = vmax.f32 %v173, 0.0
    %v205 = vmax.f32 %v176, 0.0
    %v206 = vmax.f32 %v179, 0.0
    %v207 = vmax.f32 %v182, 0.0
    %v208 = vmax.f32 %v185, 0.0
    %v209 = vmax.f32 %v188, 0.0
    %v210 = vmax.f32 %v191, 0.0
    %v211 = vmax.f32 %v194, 0.0
    %v212 = vld [vmem:[%s3] sm:$0x1]
    %v214 = vperm.slane %v212, 0
    %v216 = vmul.f32 %v196, %v214
    %v217 = vmul.f32 %v197, %v214
    %v218 = vmul.f32 %v198, %v214
    %v219 = vmul.f32 %v199, %v214
    %v220 = vmul.f32 %v200, %v214
    %v221 = vmul.f32 %v201, %v214
    %v222 = vmul.f32 %v202, %v214
    %v223 = vmul.f32 %v203, %v214
    %v224 = vmul.f32 %v204, %v214
    %v225 = vmul.f32 %v205, %v214
    %v226 = vmul.f32 %v206, %v214
    %v227 = vmul.f32 %v207, %v214
    %v228 = vmul.f32 %v208, %v214
    %v229 = vmul.f32 %v209, %v214
    %v230 = vmul.f32 %v210, %v214
    %v231 = vmul.f32 %v211, %v214
    %232 = vadd.xlane.f32.xlu0 %v216
    %v233 = vpop.xlane.xlu0 %232
    %234 = vadd.xlane.f32.xlu0 %v217
    %v235 = vpop.xlane.xlu0 %234
    %236 = vadd.xlane.f32.xlu0 %v218
    %v237 = vpop.xlane.xlu0 %236
    %238 = vadd.xlane.f32.xlu0 %v219
    %v239 = vpop.xlane.xlu0 %238
    %240 = vadd.xlane.f32.xlu0 %v220
    %v241 = vpop.xlane.xlu0 %240
    %242 = vadd.xlane.f32.xlu0 %v221
    %v243 = vpop.xlane.xlu0 %242
    %244 = vadd.xlane.f32.xlu0 %v222
    %v245 = vpop.xlane.xlu0 %244
    %246 = vadd.xlane.f32.xlu0 %v223
    %v247 = vpop.xlane.xlu0 %246
    %248 = vadd.xlane.f32.xlu0 %v224
    %v249 = vpop.xlane.xlu0 %248
    %250 = vadd.xlane.f32.xlu0 %v225
    %v251 = vpop.xlane.xlu0 %250
    %252 = vadd.xlane.f32.xlu0 %v226
    %v253 = vpop.xlane.xlu0 %252
    %254 = vadd.xlane.f32.xlu0 %v227
    %v255 = vpop.xlane.xlu0 %254
    %256 = vadd.xlane.f32.xlu0 %v228
    %v257 = vpop.xlane.xlu0 %256
    %258 = vadd.xlane.f32.xlu0 %v229
    %v259 = vpop.xlane.xlu0 %258
    %260 = vadd.xlane.f32.xlu0 %v230
    %v261 = vpop.xlane.xlu0 %260
    %262 = vadd.xlane.f32.xlu0 %v231
    %v263 = vpop.xlane.xlu0 %262
    %s264 = sld [smem:[#allocation2]]
    %v265 = vstv %s264
    %v266 = vadd.f32 %v233, %v265
    %v267 = vadd.f32 %v235, %v265
    %v268 = vadd.f32 %v237, %v265
    %v269 = vadd.f32 %v239, %v265
    %v270 = vadd.f32 %v241, %v265
    %v271 = vadd.f32 %v243, %v265
    %v272 = vadd.f32 %v245, %v265
    %v273 = vadd.f32 %v247, %v265
    %v274 = vadd.f32 %v249, %v265
    %v275 = vadd.f32 %v251, %v265
    %v276 = vadd.f32 %v253, %v265
    %v277 = vadd.f32 %v255, %v265
    %v278 = vadd.f32 %v257, %v265
    %v279 = vadd.f32 %v259, %v265
    %v280 = vadd.f32 %v261, %v265
    %v281 = vadd.f32 %v263, %v265
    %v282 = vsub.f32 0.0, %v266
    %v283 = vsub.f32 0.0, %v267
    %v284 = vsub.f32 0.0, %v268
    %v285 = vsub.f32 0.0, %v269
    %v286 = vsub.f32 0.0, %v270
    %v287 = vsub.f32 0.0, %v271
    %v288 = vsub.f32 0.0, %v272
    %v289 = vsub.f32 0.0, %v273
    %v290 = vsub.f32 0.0, %v274
    %v291 = vsub.f32 0.0, %v275
    %v292 = vsub.f32 0.0, %v276
    %v293 = vsub.f32 0.0, %v277
    %v294 = vsub.f32 0.0, %v278
    %v295 = vsub.f32 0.0, %v279
    %v296 = vsub.f32 0.0, %v280
    %v297 = vsub.f32 0.0, %v281
    %v298 = vmul.f32 %v282, 1.442695
    %v299 = vpow.pop %v298
    %v300 = vmul.f32 %v283, 1.442695
    %v301 = vpow.pop %v300
    %v302 = vmul.f32 %v284, 1.442695
    %v303 = vpow.pop %v302
    %v304 = vmul.f32 %v285, 1.442695
    %v305 = vpow.pop %v304
    %v306 = vmul.f32 %v286, 1.442695
    %v307 = vpow.pop %v306
    %v308 = vmul.f32 %v287, 1.442695
    %v309 = vpow.pop %v308
    %v310 = vmul.f32 %v288, 1.442695
    %v311 = vpow.pop %v310
    %v312 = vmul.f32 %v289, 1.442695
    %v313 = vpow.pop %v312
    %v314 = vmul.f32 %v290, 1.442695
    %v315 = vpow.pop %v314
    %v316 = vmul.f32 %v291, 1.442695
    %v317 = vpow.pop %v316
    %v318 = vmul.f32 %v292, 1.442695
    %v319 = vpow.pop %v318
    %v320 = vmul.f32 %v293, 1.442695
    %v321 = vpow.pop %v320
    %v322 = vmul.f32 %v294, 1.442695
    %v323 = vpow.pop %v322
    %v324 = vmul.f32 %v295, 1.442695
    %v325 = vpow.pop %v324
    %v326 = vmul.f32 %v296, 1.442695
    %v327 = vpow.pop %v326
    %v328 = vmul.f32 %v297, 1.442695
    %v329 = vpow.pop %v328
    %v330 = vadd.f32 %v299, 1.0
    %v331 = vadd.f32 %v301, 1.0
    %v332 = vadd.f32 %v303, 1.0
    %v333 = vadd.f32 %v305, 1.0
    %v334 = vadd.f32 %v307, 1.0
    %v335 = vadd.f32 %v309, 1.0
    %v336 = vadd.f32 %v311, 1.0
    %v337 = vadd.f32 %v313, 1.0
    %v338 = vadd.f32 %v315, 1.0
    %v339 = vadd.f32 %v317, 1.0
    %v340 = vadd.f32 %v319, 1.0
    %v341 = vadd.f32 %v321, 1.0
    %v342 = vadd.f32 %v323, 1.0
    %v343 = vadd.f32 %v325, 1.0
    %v344 = vadd.f32 %v327, 1.0
    %v345 = vadd.f32 %v329, 1.0
    %v346 = vrcp.pop %v330
    %v347 = vmul.f32 %v330, %v346
    %v348 = vsub.f32 1.0, %v347
    %v349 = vmul.f32 %v346, %v348
    %v350 = vadd.f32 %v346, %v349
    %vm351 = vweird.f32 %v330
    %vm352 = vweird.f32 %v346
    %vm353 = vmor %vm351, %vm352
    %v354 = vsel %vm353, %v346, %v350
    %v355 = vand.u32 2147483647, %v330
    %vm356 = vcmp.eq.f32.partialorder %v355, 8.507059e+37
    %v357 = vand.u32 %v330, 2147483648
    %v358 = vor.u32 1.1754944e-38, %v357
    %v359 = vsel %vm356, %v358, %v354
    %v360 = vmul.f32 1.0, %v359
    %v361 = vrcp.pop %v331
    %v362 = vmul.f32 %v331, %v361
    %v363 = vsub.f32 1.0, %v362
    %v364 = vmul.f32 %v361, %v363
    %v365 = vadd.f32 %v361, %v364
    %vm366 = vweird.f32 %v331
    %vm367 = vweird.f32 %v361
    %vm368 = vmor %vm366, %vm367
    %v369 = vsel %vm368, %v361, %v365
    %v370 = vand.u32 2147483647, %v331
    %vm371 = vcmp.eq.f32.partialorder %v370, 8.507059e+37
    %v372 = vand.u32 %v331, 2147483648
    %v373 = vor.u32 1.1754944e-38, %v372
    %v374 = vsel %vm371, %v373, %v369
    %v375 = vmul.f32 1.0, %v374
    %v376 = vrcp.pop %v332
    %v377 = vmul.f32 %v332, %v376
    %v378 = vsub.f32 1.0, %v377
    %v379 = vmul.f32 %v376, %v378
    %v380 = vadd.f32 %v376, %v379
    %vm381 = vweird.f32 %v332
    %vm382 = vweird.f32 %v376
    %vm383 = vmor %vm381, %vm382
    %v384 = vsel %vm383, %v376, %v380
    %v385 = vand.u32 2147483647, %v332
    %vm386 = vcmp.eq.f32.partialorder %v385, 8.507059e+37
    %v387 = vand.u32 %v332, 2147483648
    %v388 = vor.u32 1.1754944e-38, %v387
    %v389 = vsel %vm386, %v388, %v384
    %v390 = vmul.f32 1.0, %v389
    %v391 = vrcp.pop %v333
    %v392 = vmul.f32 %v333, %v391
    %v393 = vsub.f32 1.0, %v392
    %v394 = vmul.f32 %v391, %v393
    %v395 = vadd.f32 %v391, %v394
    %vm396 = vweird.f32 %v333
    %vm397 = vweird.f32 %v391
    %vm398 = vmor %vm396, %vm397
    %v399 = vsel %vm398, %v391, %v395
    %v400 = vand.u32 2147483647, %v333
    %vm401 = vcmp.eq.f32.partialorder %v400, 8.507059e+37
    %v402 = vand.u32 %v333, 2147483648
    %v403 = vor.u32 1.1754944e-38, %v402
    %v404 = vsel %vm401, %v403, %v399
    %v405 = vmul.f32 1.0, %v404
    %v406 = vrcp.pop %v334
    %v407 = vmul.f32 %v334, %v406
    %v408 = vsub.f32 1.0, %v407
    %v409 = vmul.f32 %v406, %v408
    %v410 = vadd.f32 %v406, %v409
    %vm411 = vweird.f32 %v334
    %vm412 = vweird.f32 %v406
    %vm413 = vmor %vm411, %vm412
    %v414 = vsel %vm413, %v406, %v410
    %v415 = vand.u32 2147483647, %v334
    %vm416 = vcmp.eq.f32.partialorder %v415, 8.507059e+37
    %v417 = vand.u32 %v334, 2147483648
    %v418 = vor.u32 1.1754944e-38, %v417
    %v419 = vsel %vm416, %v418, %v414
    %v420 = vmul.f32 1.0, %v419
    %v421 = vrcp.pop %v335
    %v422 = vmul.f32 %v335, %v421
    %v423 = vsub.f32 1.0, %v422
    %v424 = vmul.f32 %v421, %v423
    %v425 = vadd.f32 %v421, %v424
    %vm426 = vweird.f32 %v335
    %vm427 = vweird.f32 %v421
    %vm428 = vmor %vm426, %vm427
    %v429 = vsel %vm428, %v421, %v425
    %v430 = vand.u32 2147483647, %v335
    %vm431 = vcmp.eq.f32.partialorder %v430, 8.507059e+37
    %v432 = vand.u32 %v335, 2147483648
    %v433 = vor.u32 1.1754944e-38, %v432
    %v434 = vsel %vm431, %v433, %v429
    %v435 = vmul.f32 1.0, %v434
    %v436 = vrcp.pop %v336
    %v437 = vmul.f32 %v336, %v436
    %v438 = vsub.f32 1.0, %v437
    %v439 = vmul.f32 %v436, %v438
    %v440 = vadd.f32 %v436, %v439
    %vm441 = vweird.f32 %v336
    %vm442 = vweird.f32 %v436
    %vm443 = vmor %vm441, %vm442
    %v444 = vsel %vm443, %v436, %v440
    %v445 = vand.u32 2147483647, %v336
    %vm446 = vcmp.eq.f32.partialorder %v445, 8.507059e+37
    %v447 = vand.u32 %v336, 2147483648
    %v448 = vor.u32 1.1754944e-38, %v447
    %v449 = vsel %vm446, %v448, %v444
    %v450 = vmul.f32 1.0, %v449
    %v451 = vrcp.pop %v337
    %v452 = vmul.f32 %v337, %v451
    %v453 = vsub.f32 1.0, %v452
    %v454 = vmul.f32 %v451, %v453
    %v455 = vadd.f32 %v451, %v454
    %vm456 = vweird.f32 %v337
    %vm457 = vweird.f32 %v451
    %vm458 = vmor %vm456, %vm457
    %v459 = vsel %vm458, %v451, %v455
    %v460 = vand.u32 2147483647, %v337
    %vm461 = vcmp.eq.f32.partialorder %v460, 8.507059e+37
    %v462 = vand.u32 %v337, 2147483648
    %v463 = vor.u32 1.1754944e-38, %v462
    %v464 = vsel %vm461, %v463, %v459
    %v465 = vmul.f32 1.0, %v464
    %v466 = vrcp.pop %v338
    %v467 = vmul.f32 %v338, %v466
    %v468 = vsub.f32 1.0, %v467
    %v469 = vmul.f32 %v466, %v468
    %v470 = vadd.f32 %v466, %v469
    %vm471 = vweird.f32 %v338
    %vm472 = vweird.f32 %v466
    %vm473 = vmor %vm471, %vm472
    %v474 = vsel %vm473, %v466, %v470
    %v475 = vand.u32 2147483647, %v338
    %vm476 = vcmp.eq.f32.partialorder %v475, 8.507059e+37
    %v477 = vand.u32 %v338, 2147483648
    %v478 = vor.u32 1.1754944e-38, %v477
    %v479 = vsel %vm476, %v478, %v474
    %v480 = vmul.f32 1.0, %v479
    %v481 = vrcp.pop %v339
    %v482 = vmul.f32 %v339, %v481
    %v483 = vsub.f32 1.0, %v482
    %v484 = vmul.f32 %v481, %v483
    %v485 = vadd.f32 %v481, %v484
    %vm486 = vweird.f32 %v339
    %vm487 = vweird.f32 %v481
    %vm488 = vmor %vm486, %vm487
    %v489 = vsel %vm488, %v481, %v485
    %v490 = vand.u32 2147483647, %v339
    %vm491 = vcmp.eq.f32.partialorder %v490, 8.507059e+37
    %v492 = vand.u32 %v339, 2147483648
    %v493 = vor.u32 1.1754944e-38, %v492
    %v494 = vsel %vm491, %v493, %v489
    %v495 = vmul.f32 1.0, %v494
    %v496 = vrcp.pop %v340
    %v497 = vmul.f32 %v340, %v496
    %v498 = vsub.f32 1.0, %v497
    %v499 = vmul.f32 %v496, %v498
    %v500 = vadd.f32 %v496, %v499
    %vm501 = vweird.f32 %v340
    %vm502 = vweird.f32 %v496
    %vm503 = vmor %vm501, %vm502
    %v504 = vsel %vm503, %v496, %v500
    %v505 = vand.u32 2147483647, %v340
    %vm506 = vcmp.eq.f32.partialorder %v505, 8.507059e+37
    %v507 = vand.u32 %v340, 2147483648
    %v508 = vor.u32 1.1754944e-38, %v507
    %v509 = vsel %vm506, %v508, %v504
    %v510 = vmul.f32 1.0, %v509
    %v511 = vrcp.pop %v341
    %v512 = vmul.f32 %v341, %v511
    %v513 = vsub.f32 1.0, %v512
    %v514 = vmul.f32 %v511, %v513
    %v515 = vadd.f32 %v511, %v514
    %vm516 = vweird.f32 %v341
    %vm517 = vweird.f32 %v511
    %vm518 = vmor %vm516, %vm517
    %v519 = vsel %vm518, %v511, %v515
    %v520 = vand.u32 2147483647, %v341
    %vm521 = vcmp.eq.f32.partialorder %v520, 8.507059e+37
    %v522 = vand.u32 %v341, 2147483648
    %v523 = vor.u32 1.1754944e-38, %v522
    %v524 = vsel %vm521, %v523, %v519
    %v525 = vmul.f32 1.0, %v524
    %v526 = vrcp.pop %v342
    %v527 = vmul.f32 %v342, %v526
    %v528 = vsub.f32 1.0, %v527
    %v529 = vmul.f32 %v526, %v528
    %v530 = vadd.f32 %v526, %v529
    %vm531 = vweird.f32 %v342
    %vm532 = vweird.f32 %v526
    %vm533 = vmor %vm531, %vm532
    %v534 = vsel %vm533, %v526, %v530
    %v535 = vand.u32 2147483647, %v342
    %vm536 = vcmp.eq.f32.partialorder %v535, 8.507059e+37
    %v537 = vand.u32 %v342, 2147483648
    %v538 = vor.u32 1.1754944e-38, %v537
    %v539 = vsel %vm536, %v538, %v534
    %v540 = vmul.f32 1.0, %v539
    %v541 = vrcp.pop %v343
    %v542 = vmul.f32 %v343, %v541
    %v543 = vsub.f32 1.0, %v542
    %v544 = vmul.f32 %v541, %v543
    %v545 = vadd.f32 %v541, %v544
    %vm546 = vweird.f32 %v343
    %vm547 = vweird.f32 %v541
    %vm548 = vmor %vm546, %vm547
    %v549 = vsel %vm548, %v541, %v545
    %v550 = vand.u32 2147483647, %v343
    %vm551 = vcmp.eq.f32.partialorder %v550, 8.507059e+37
    %v552 = vand.u32 %v343, 2147483648
    %v553 = vor.u32 1.1754944e-38, %v552
    %v554 = vsel %vm551, %v553, %v549
    %v555 = vmul.f32 1.0, %v554
    %v556 = vrcp.pop %v344
    %v557 = vmul.f32 %v344, %v556
    %v558 = vsub.f32 1.0, %v557
    %v559 = vmul.f32 %v556, %v558
    %v560 = vadd.f32 %v556, %v559
    %vm561 = vweird.f32 %v344
    %vm562 = vweird.f32 %v556
    %vm563 = vmor %vm561, %vm562
    %v564 = vsel %vm563, %v556, %v560
    %v565 = vand.u32 2147483647, %v344
    %vm566 = vcmp.eq.f32.partialorder %v565, 8.507059e+37
    %v567 = vand.u32 %v344, 2147483648
    %v568 = vor.u32 1.1754944e-38, %v567
    %v569 = vsel %vm566, %v568, %v564
    %v570 = vmul.f32 1.0, %v569
    %v571 = vrcp.pop %v345
    %v572 = vmul.f32 %v345, %v571
    %v573 = vsub.f32 1.0, %v572
    %v574 = vmul.f32 %v571, %v573
    %v575 = vadd.f32 %v571, %v574
    %vm576 = vweird.f32 %v345
    %vm577 = vweird.f32 %v571
    %vm578 = vmor %vm576, %vm577
    %v579 = vsel %vm578, %v571, %v575
    %v580 = vand.u32 2147483647, %v345
    %vm581 = vcmp.eq.f32.partialorder %v580, 8.507059e+37
    %v582 = vand.u32 %v345, 2147483648
    %v583 = vor.u32 1.1754944e-38, %v582
    %v584 = vsel %vm581, %v583, %v579
    %v585 = vmul.f32 1.0, %v584
    %v602 = vlaneseq
    %v603 = vand.u32 %v602, 127
    %v604 = vperm.slane %v360, %v603
    %v605 = vadd.s32 %v603, 4294967288
    %v606 = vperm.slane %v375, %v605
    %vm607 = vcmask 130112
    %v608 = vsel %vm607, %v606, %v604
    %v609 = vadd.s32 %v603, 4294967280
    %v610 = vperm.slane %v390, %v609
    %vm611 = vcmask 195712
    %v612 = vsel %vm611, %v610, %v608
    %v613 = vadd.s32 %v603, 4294967272
    %v614 = vperm.slane %v405, %v613
    %vm615 = vcmask 261312
    %v616 = vsel %vm615, %v614, %v612
    %v617 = vadd.s32 %v603, 4294967264
    %v618 = vperm.slane %v420, %v617
    %vm619 = vcmask 326912
    %v620 = vsel %vm619, %v618, %v616
    %v621 = vadd.s32 %v603, 4294967256
    %v622 = vperm.slane %v435, %v621
    %vm623 = vcmask 392512
    %v624 = vsel %vm623, %v622, %v620
    %v625 = vadd.s32 %v603, 4294967248
    %v626 = vperm.slane %v450, %v625
    %vm627 = vcmask 458112
    %v628 = vsel %vm627, %v626, %v624
    %v629 = vadd.s32 %v603, 4294967240
    %v630 = vperm.slane %v465, %v629
    %vm631 = vcmask 523712
    %v632 = vsel %vm631, %v630, %v628
    %v633 = vadd.s32 %v603, 4294967232
    %v634 = vperm.slane %v480, %v633
    %vm635 = vcmask 589312
    %v636 = vsel %vm635, %v634, %v632
    %v637 = vadd.s32 %v603, 4294967224
    %v638 = vperm.slane %v495, %v637
    %vm639 = vcmask 654912
    %v640 = vsel %vm639, %v638, %v636
    %v641 = vadd.s32 %v603, 4294967216
    %v642 = vperm.slane %v510, %v641
    %vm643 = vcmask 720512
    %v644 = vsel %vm643, %v642, %v640
    %v645 = vadd.s32 %v603, 4294967208
    %v646 = vperm.slane %v525, %v645
    %vm647 = vcmask 786112
    %v648 = vsel %vm647, %v646, %v644
    %v649 = vadd.s32 %v603, 4294967200
    %v650 = vperm.slane %v540, %v649
    %vm651 = vcmask 851712
    %v652 = vsel %vm651, %v650, %v648
    %v653 = vadd.s32 %v603, 4294967192
    %v654 = vperm.slane %v555, %v653
    %vm655 = vcmask 917312
    %v656 = vsel %vm655, %v654, %v652
    %v657 = vadd.s32 %v603, 4294967184
    %v658 = vperm.slane %v570, %v657
    %vm659 = vcmask 982912
    %v660 = vsel %vm659, %v658, %v656
    %v661 = vadd.s32 %v603, 4294967176
    %v662 = vperm.slane %v585, %v661
    %vm663 = vcmask 1048512
    %v664 = vsel %vm663, %v662, %v660
    %666 = vst [vmem:[#allocation8] sm:$0x1] %v664
    // Predicated region
    $region30: #{tpu_custom_call.1} parent=1 // pred_check
      _
    $region31: #{tpu_custom_call.1} parent=1 // pred_check_branch
      %668 = sbr.rel (0) target = $region33
    $region32: #{tpu_custom_call.1} parent=1 // pred_region
      %670 = vsyncadd [#allocation5], 0
      %s672 = sshll.u32 [#allocation8], 4
      %s673 = int_to_ptr.vmem [resolvable:$true] %s672
      %s674 = sshll.u32 %s5, 4
      %s675 = int_to_ptr.hbm [resolvable:$true] %s674
      %677 = dma.vmem_to_hbm [thread:$0]  %s673, 16, %s675, [#allocation5]
    $region33: #{tpu_custom_call.1} parent=1 // pred_fallthru
      _
    // Predicated region
    $region34: #{tpu_custom_call.1} parent=1 // pred_check
      _
    $region35: #{tpu_custom_call.1} parent=1 // pred_check_branch
      %679 = sbr.rel (0) target = $region37
    $region36: #{tpu_custom_call.1} parent=1 // pred_region
      %681 = dma.done [#allocation5], 16
    $region37: #{tpu_custom_call.1} parent=1 // pred_fallthru
      _
    %682 = vsyncpa [#allocation4], 1
    %683 = vsyncpa [#allocation7], 1
    %684 = vsyncpa [#allocation5], 1

</llo_original>
